<compile_context>
chip_gen: v5e
topology: v5e:2x2
jax: 0.10.0
libtpu: 0.0.40
codegen_flags: <defaults>
</compile_context>

<pallas_src>
from functools import partial

import jax
import jax.numpy as jnp
from jax.experimental import pallas as pl
from jax.experimental.pallas import tpu as pltpu

IGNORE_INDEX = 255


def _ce_kernel(x_ref, t_ref, sum_ref, cnt_ref, *, hw, ignore_index):
    # x_ref: (1, C, TP) logits tile, t_ref: (1, 1, TP) int32 targets tile
    # sum_ref / cnt_ref: (1, 1, 1, 1) per-tile partial loss sum / valid count.
    x = x_ref[0].astype(jnp.float32)            # (C, TP) channels on sublanes
    t = t_ref[0]                                # (1, TP) int32

    # numerically-stable log-softmax along channels (axis 0)
    m = jnp.max(x, axis=0, keepdims=True)       # (1, TP)
    z = x - m
    lse = jnp.log(jnp.sum(jnp.exp(z), axis=0, keepdims=True))        # (1, TP)

    # pick z at the target class; the one-hot select is fused into the reduce
    class_iota = jax.lax.broadcasted_iota(jnp.int32, z.shape, 0)     # (C, TP)
    picked_z = jnp.sum(jnp.where(class_iota == t, z, 0.0),
                       axis=0, keepdims=True)                        # (1, TP)
    nll = lse - picked_z                                             # -log p[target]

    # validity: not ignore_index and inside the real pixel range (ragged tail)
    tp = t.shape[-1]
    pix = pl.program_id(1) * tp + jax.lax.broadcasted_iota(jnp.int32, t.shape, 1)
    valid = (t != ignore_index) & (pix < hw)

    tile_sum = jnp.sum(jnp.where(valid, nll, 0.0), axis=-1, keepdims=True)  # (1, 1)
    tile_cnt = jnp.sum(jnp.where(valid, 1.0, 0.0), axis=-1, keepdims=True)  # (1, 1)
    sum_ref[...] = tile_sum.reshape(1, 1, 1, 1)
    cnt_ref[...] = tile_cnt.reshape(1, 1, 1, 1)


def _choose_pixel_tile(hw, c, itemsize):
    """Largest lane-aligned pixel tile within a v7x-safe VMEM budget."""
    per_pix = 2 * c * itemsize + 2 * 4      # double-buffered logits + int32 targets
    vmem_budget = 48 << 20                  # headroom inside v7x's 64 MiB VMEM
    target_block = 4 << 20                  # ~4 MiB logit blocks amortize step overhead
    tile = min(vmem_budget // per_pix,
               max(128, target_block // (c * itemsize)),
               65536)
    tile = max(128, (tile // 128) * 128)
    if tile >= hw:
        return hw                           # single block == full dim (always legal)
    return tile


def cross_entropy_loss_2d(inputs, targets, *, ignore_index=IGNORE_INDEX):
    """inputs: (N, C, H, W) float, targets: (N, H, W) int. Returns scalar mean loss."""
    N, C, H, W = inputs.shape
    HW = H * W

    # Free reshapes only: no transpose, no pad -> no extra HBM passes.
    x = inputs.reshape(N, C, HW)
    # NOTE: targets could be narrowed to int16/uint8 in HBM to cut DMA bytes for
    # tiny C; kept int32 here for maximum lowering robustness.
    t = targets.reshape(N, 1, HW).astype(jnp.int32)

    itemsize = jnp.dtype(x.dtype).itemsize
    tile = _choose_pixel_tile(HW, C, itemsize)
    n_pix_tiles = pl.cdiv(HW, tile)

    vmem_needed = 2 * (C * tile * itemsize) + 2 * (tile * 4) + (2 << 20)
    vmem_limit = int(min(56 << 20, max(32 << 20, vmem_needed)))

    kernel = partial(_ce_kernel, hw=HW, ignore_index=ignore_index)

    psum, pcnt = pl.pallas_call(
        kernel,
        out_shape=(
            jax.ShapeDtypeStruct((N, n_pix_tiles, 1, 1), jnp.float32),
            jax.ShapeDtypeStruct((N, n_pix_tiles, 1, 1), jnp.float32),
        ),
        grid_spec=pltpu.PrefetchScalarGridSpec(
            num_scalar_prefetch=0,
            grid=(N, n_pix_tiles),
            in_specs=[
                pl.BlockSpec((1, C, tile), lambda n, i: (n, 0, i)),
                pl.BlockSpec((1, 1, tile), lambda n, i: (n, 0, i)),
            ],
            out_specs=[
                pl.BlockSpec((1, 1, 1, 1), lambda n, i: (n, i, 0, 0)),
                pl.BlockSpec((1, 1, 1, 1), lambda n, i: (n, i, 0, 0)),
            ],
        ),
        compiler_params=pltpu.CompilerParams(
            dimension_semantics=("parallel", "parallel"),
            vmem_limit_bytes=vmem_limit,
        ),
    )(x, t)

    # size_average=True: mean over non-ignored pixels (NaN if all ignored,
    # matching PyTorch behavior).
    return jnp.sum(psum) / jnp.sum(pcnt)


def _reference(inputs, targets):
    # pure-JAX reference of NLLLoss2d(log_softmax(x, dim=1), t) with ignore_index=255
    logp = jax.nn.log_softmax(inputs.astype(jnp.float32), axis=1)   # (N,C,H,W)
    t = targets.astype(jnp.int32)
    valid = (t != IGNORE_INDEX)
    t_safe = jnp.where(valid, t, 0)
    picked = jnp.take_along_axis(logp, t_safe[:, None, :, :], axis=1)[:, 0]
    losses = jnp.where(valid, -picked, 0.0)
    return jnp.sum(losses) / jnp.sum(valid.astype(jnp.float32))


if __name__ == "__main__":
    key = jax.random.PRNGKey(0)
    k1, k2, k3 = jax.random.split(key, 3)

    N, C, H, W = 2, 4, 16, 16
    inputs = jax.random.normal(k1, (N, C, H, W), dtype=jnp.float32)
    targets = jax.random.randint(k2, (N, H, W), 0, C).astype(jnp.int32)
    # sprinkle some ignored pixels (ignore_index=255)
    ignore_mask = jax.random.bernoulli(k3, 0.1, (N, H, W))
    targets = jnp.where(ignore_mask, IGNORE_INDEX, targets)

    loss = cross_entropy_loss_2d(inputs, targets)
    loss = jax.block_until_ready(loss)

    ref = _reference(inputs, targets)
    assert jnp.allclose(loss, ref, atol=1e-5, rtol=1e-5), (loss, ref)

    print("KERNEL_OK")
</pallas_src>

<mosaic_0001>
module attributes {stable_mosaic.version = 11 : i64} {
  func.func @_ce_kernel(%arg0: i32, %arg1: i32, %arg2: memref<1x4x256xf32, #tpu.memory_space<vmem>>, %arg3: memref<1x1x256xi32, #tpu.memory_space<vmem>>, %arg4: memref<1x1x1x1xf32, #tpu.memory_space<vmem>>, %arg5: memref<1x1x1x1xf32, #tpu.memory_space<vmem>>) attributes {dimension_semantics = [#tpu.dimension_semantics<parallel>, #tpu.dimension_semantics<parallel>], iteration_bounds = array<i64: 2, 1>, scalar_prefetch = 0 : i64, scratch_operands = 0 : i64, tpu.core_type = #tpu.core_type<tc>, window_params = [{transform_indices = @transform_0, window_bounds = array<i64: 1, 4, 256>}, {transform_indices = @transform_1, window_bounds = array<i64: 1, 1, 256>}, {transform_indices = @transform_2, window_bounds = array<i64: 1, 1, 1, 1>}, {transform_indices = @transform_3, window_bounds = array<i64: 1, 1, 1, 1>}]} {
    %c0 = arith.constant 0 : index
    %c0_0 = arith.constant 0 : index
    %c0_1 = arith.constant 0 : index
    %0 = vector.load %arg2[%c0, %c0_0, %c0_1] : memref<1x4x256xf32, #tpu.memory_space<vmem>>, vector<1x4x256xf32>
    %1 = vector.shape_cast %0 : vector<1x4x256xf32> to vector<4x256xf32>
    %c0_2 = arith.constant 0 : index
    %c0_3 = arith.constant 0 : index
    %c0_4 = arith.constant 0 : index
    %2 = vector.load %arg3[%c0_2, %c0_3, %c0_4] : memref<1x1x256xi32, #tpu.memory_space<vmem>>, vector<1x1x256xi32>
    %3 = vector.shape_cast %2 : vector<1x1x256xi32> to vector<1x256xi32>
    %cst = arith.constant dense<0xFF800000> : vector<256xf32>
    %4 = vector.multi_reduction <maximumf>, %1, %cst [0] : vector<4x256xf32> to vector<256xf32>
    %5 = vector.shape_cast %4 : vector<256xf32> to vector<1x256xf32>
    %6 = vector.broadcast %5 : vector<1x256xf32> to vector<4x256xf32>
    %7 = arith.subf %1, %6 : vector<4x256xf32>
    %8 = math.exp %7 : vector<4x256xf32>
    %cst_5 = arith.constant dense<0.000000e+00> : vector<256xf32>
    %9 = vector.multi_reduction <add>, %8, %cst_5 [0] : vector<4x256xf32> to vector<256xf32>
    %10 = vector.shape_cast %9 : vector<256xf32> to vector<1x256xf32>
    %11 = math.log %10 : vector<1x256xf32>
    %12 = tpu.iota {dimensions = array<i32: 0>} : vector<4x256xi32>
    %13 = vector.broadcast %3 : vector<1x256xi32> to vector<4x256xi32>
    %14 = arith.cmpi eq, %12, %13 : vector<4x256xi32>
    %cst_6 = arith.constant 0.000000e+00 : f32
    %15 = vector.broadcast %cst_6 : f32 to vector<4x256xf32>
    %16 = arith.select %14, %7, %15 : vector<4x256xi1>, vector<4x256xf32>
    %cst_7 = arith.constant dense<0.000000e+00> : vector<256xf32>
    %17 = vector.multi_reduction <add>, %16, %cst_7 [0] : vector<4x256xf32> to vector<256xf32>
    %18 = vector.shape_cast %17 : vector<256xf32> to vector<1x256xf32>
    %19 = arith.subf %11, %18 : vector<1x256xf32>
    %c256_i32 = arith.constant 256 : i32
    %20 = arith.muli %arg1, %c256_i32 : i32
    %21 = tpu.iota {dimensions = array<i32: 1>} : vector<1x256xi32>
    %22 = vector.broadcast %20 : i32 to vector<1x256xi32>
    %23 = arith.addi %22, %21 : vector<1x256xi32>
    %c255_i32 = arith.constant 255 : i32
    %24 = vector.broadcast %c255_i32 : i32 to vector<1x256xi32>
    %25 = arith.cmpi ne, %3, %24 : vector<1x256xi32>
    %c256_i32_8 = arith.constant 256 : i32
    %26 = vector.broadcast %c256_i32_8 : i32 to vector<1x256xi32>
    %27 = arith.cmpi slt, %23, %26 : vector<1x256xi32>
    %28 = arith.andi %25, %27 : vector<1x256xi1>
    %cst_9 = arith.constant 0.000000e+00 : f32
    %29 = vector.broadcast %cst_9 : f32 to vector<1x256xf32>
    %30 = arith.select %28, %19, %29 : vector<1x256xi1>, vector<1x256xf32>
    %cst_10 = arith.constant dense<0.000000e+00> : vector<1xf32>
    %31 = vector.multi_reduction <add>, %30, %cst_10 [1] : vector<1x256xf32> to vector<1xf32>
    %32 = vector.shape_cast %31 : vector<1xf32> to vector<1x1xf32>
    %cst_11 = arith.constant 1.000000e+00 : f32
    %cst_12 = arith.constant 0.000000e+00 : f32
    %33 = vector.broadcast %cst_11 : f32 to vector<1x256xf32>
    %34 = vector.broadcast %cst_12 : f32 to vector<1x256xf32>
    %35 = arith.select %28, %33, %34 : vector<1x256xi1>, vector<1x256xf32>
    %cst_13 = arith.constant dense<0.000000e+00> : vector<1xf32>
    %36 = vector.multi_reduction <add>, %35, %cst_13 [1] : vector<1x256xf32> to vector<1xf32>
    %37 = vector.shape_cast %36 : vector<1xf32> to vector<1x1xf32>
    %38 = vector.shape_cast %32 : vector<1x1xf32> to vector<1x1x1x1xf32>
    %c0_14 = arith.constant 0 : index
    %c0_15 = arith.constant 0 : index
    %c0_16 = arith.constant 0 : index
    %c0_17 = arith.constant 0 : index
    %39 = vector.load %arg4[%c0_14, %c0_15, %c0_16, %c0_17] : memref<1x1x1x1xf32, #tpu.memory_space<vmem>>, vector<1x1x1x1xf32>
    tpu.vector_store %arg4[%c0_14, %c0_15, %c0_16, %c0_17], %38 {strides = array<i32>} : memref<1x1x1x1xf32, #tpu.memory_space<vmem>>, vector<1x1x1x1xf32>,
    %40 = vector.shape_cast %37 : vector<1x1xf32> to vector<1x1x1x1xf32>
    %c0_18 = arith.constant 0 : index
    %c0_19 = arith.constant 0 : index
    %c0_20 = arith.constant 0 : index
    %c0_21 = arith.constant 0 : index
    %41 = vector.load %arg5[%c0_18, %c0_19, %c0_20, %c0_21] : memref<1x1x1x1xf32, #tpu.memory_space<vmem>>, vector<1x1x1x1xf32>
    tpu.vector_store %arg5[%c0_18, %c0_19, %c0_20, %c0_21], %40 {strides = array<i32>} : memref<1x1x1x1xf32, #tpu.memory_space<vmem>>, vector<1x1x1x1xf32>,
    return
  }
  func.func @transform_0(%arg0: i32, %arg1: i32) -> (i32, i32, i32) {
    %c0_i32 = arith.constant 0 : i32
    %c0_i32_0 = arith.constant 0 : i32
    return %arg0, %c0_i32, %arg1 : i32, i32, i32
  }
  func.func @transform_1(%arg0: i32, %arg1: i32) -> (i32, i32, i32) {
    %c0_i32 = arith.constant 0 : i32
    %c0_i32_0 = arith.constant 0 : i32
    return %arg0, %c0_i32, %arg1 : i32, i32, i32
  }
  func.func @transform_2(%arg0: i32, %arg1: i32) -> (i32, i32, i32, i32) {
    %c0_i32 = arith.constant 0 : i32
    %c0_i32_0 = arith.constant 0 : i32
    %c0_i32_1 = arith.constant 0 : i32
    return %arg0, %arg1, %c0_i32, %c0_i32_0 : i32, i32, i32, i32
  }
  func.func @transform_3(%arg0: i32, %arg1: i32) -> (i32, i32, i32, i32) {
    %c0_i32 = arith.constant 0 : i32
    %c0_i32_0 = arith.constant 0 : i32
    %c0_i32_1 = arith.constant 0 : i32
    return %arg0, %arg1, %c0_i32, %c0_i32_0 : i32, i32, i32, i32
  }
}

</mosaic_0001>

<llo_original>
// kernel: tpu_custom_call.1
$region0: #{tpu_custom_call.1}
  #allocation0 [shape = 'u32[]', space=smem, size = 0x4, offset = 0x4, fixed_abs, tag = 'smem constant byte address 0x4 - core index']
  #allocation1 [shape = 'u32[72,128]{1,0:T(1,128)}', space=vmem, size = 0x9000, scoped, tag = 'internal scratch']
  %s0 = inlined_call_operand.hbm [shape: f32[2,4,256], index: 0, kind: input, shape index: {}]
  %s1 = inlined_call_operand.hbm [shape: s32[2,1,256], index: 1, kind: input, shape index: {}]
  %s2 = inlined_call_operand.vmem [shape: f32[2,1,1,1], index: 2, kind: output, shape index: {0}]
  %s3 = inlined_call_operand.vmem [shape: f32[2,1,1,1], index: 3, kind: output, shape index: {1}]
  %4 = xla_tuple %s2, %s3
  %s5 = sld [smem:[#allocation0]]
  $region57: #{tpu_custom_call.1} parent=0
    _
  %s7 = ssub.s32 1, %s5
  %s8 = scalar_select 0, %s7, %s5
  $region1: #{tpu_custom_call.1} parent=0
    #allocation2 [shape = 'u8[8192]{0}', space=vmem, size = 0x2000, scoped, tag = 'input window, operand 0']
    #allocation3 [shape = 's32[2]{0}', space=sflag, size = 0x8, scoped, tag = 'scoped memory for tpu_custom_call.1']
    #allocation4 [shape = 'u8[2048]{0}', space=vmem, size = 0x800, scoped, tag = 'input window, operand 1']
    #allocation5 [shape = 's32[2]{0}', space=sflag, size = 0x8, scoped, tag = 'scoped memory for tpu_custom_call.1']
    %9 = vsyncpa [#allocation3], 0
    %s10 = scalar_lea.sflag [#allocation3], 1
    %11 = vsyncpa %s10, 0
    %12 = vsyncpa [#allocation5], 0
    %s13 = scalar_lea.sflag [#allocation5], 1
    %14 = vsyncpa %s13, 0
    loop: start=0, step=1, limit=4
    $region2: #{tpu_custom_call.1} parent=1 // loop_pre_header
      _
    $region3: #{tpu_custom_call.1} parent=1 // loop_header
      %s16 = sphi 0, %s20
      %p17 = scmp.ge.s32.totalorder %s16, 4
      %s23 = sphi 0, %s35
      %s24 = sphi 0, %s31
      %s25 = sphi 0, %s23
      %s26 = sphi 0, %s24
      %s27 = sphi 0, %s25
      %s28 = sphi 0, %s26
      %s40 = sphi 0, %s42
      %s43 = sphi 0, %s40
      %s44 = sphi 0, %s43
      %s60 = sphi 0, %s44
      %s68 = sphi 0, %s70
      %s71 = sphi 0, %s68
      %s72 = sphi 0, %s71
      %s88 = sphi 0, %s72
      %s96 = sphi 0, %s98
      %s99 = sphi 0, %s96
      %s100 = sphi 0, %s99
      %s116 = sphi 0, %s100
      %s124 = sphi 0, %s126
      %s127 = sphi 0, %s124
      %s128 = sphi 0, %s127
      %s144 = sphi 0, %s128
    $region4: #{tpu_custom_call.1} parent=1 // loop_header_branch
      %19 = sbr.rel (%p17) target = $region8
    $region5: #{tpu_custom_call.1} parent=1 // loop_body
      %s21 = ssub.s32 %s16, 1
      %s22 = ssub.s32 %s16, 2
      %s29 = sadd.s32 1, %s24
      %p30 = scmp.ge.s32.totalorder %s29, 1
      %s31 = scalar_select %p30, 0, %s29
      %s32 = sadd.s32 1, %s23
      %s33 = scalar_select %p30, %s32, %s23
      %p34 = scmp.ge.s32.totalorder %s33, 2
      %s35 = scalar_select %p34, 0, %s33
      %s36 = ssub.s32 %s23, %s35
      %s37 = ssub.s32 %s24, %s31
      %s38 = sor.u32 %s36, %s37
      %p39 = scmp.eq.s32.totalorder %s38, 0
      %s41 = sadd.s32 %s40, 1
      %s42 = scalar_select %p39, %s40, %s41
      %p45 = pneg %p39
      %p46 = scmp.eq.s32.totalorder %s16, 1
      %p47 = por %p45, %p46
      %p48 = scmp.ne.s32.totalorder %s40, %s43
      %p49 = scmp.eq.s32.totalorder %s16, 0
      %p50 = por %p48, %p49
      %p51 = scmp.ne.s32.totalorder %s40, %s43
      %p52 = scmp.eq.s32.totalorder %s21, 1
      %p53 = por %p51, %p52
      %p54 = scmp.ne.s32.totalorder %s43, %s44
      %p55 = scmp.eq.s32.totalorder %s21, 0
      %p56 = por %p54, %p55
      %p57 = scmp.ne.s32.totalorder %s43, %s44
      %p58 = scmp.eq.s32.totalorder %s22, 1
      %p59 = por %p57, %p58
      %p61 = scmp.ne.s32.totalorder %s44, %s60
      %p62 = scmp.eq.s32.totalorder %s22, 0
      %p63 = por %p61, %p62
      %s64 = ssub.s32 %s23, %s35
      %s65 = ssub.s32 %s24, %s31
      %s66 = sor.u32 %s64, %s65
      %p67 = scmp.eq.s32.totalorder %s66, 0
      %s69 = sadd.s32 %s68, 1
      %s70 = scalar_select %p67, %s68, %s69
      %p73 = pneg %p67
      %p74 = scmp.eq.s32.totalorder %s16, 1
      %p75 = por %p73, %p74
      %p76 = scmp.ne.s32.totalorder %s68, %s71
      %p77 = scmp.eq.s32.totalorder %s16, 0
      %p78 = por %p76, %p77
      %p79 = scmp.ne.s32.totalorder %s68, %s71
      %p80 = scmp.eq.s32.totalorder %s21, 1
      %p81 = por %p79, %p80
      %p82 = scmp.ne.s32.totalorder %s71, %s72
      %p83 = scmp.eq.s32.totalorder %s21, 0
      %p84 = por %p82, %p83
      %p85 = scmp.ne.s32.totalorder %s71, %s72
      %p86 = scmp.eq.s32.totalorder %s22, 1
      %p87 = por %p85, %p86
      %p89 = scmp.ne.s32.totalorder %s72, %s88
      %p90 = scmp.eq.s32.totalorder %s22, 0
      %p91 = por %p89, %p90
      %s92 = ssub.s32 %s23, %s35
      %s93 = ssub.s32 %s24, %s31
      %s94 = sor.u32 %s92, %s93
      %p95 = scmp.eq.s32.totalorder %s94, 0
      %s97 = sadd.s32 %s96, 1
      %s98 = scalar_select %p95, %s96, %s97
      %p101 = pneg %p95
      %p102 = scmp.eq.s32.totalorder %s16, 1
      %p103 = por %p101, %p102
      %p104 = scmp.ne.s32.totalorder %s96, %s99
      %p105 = scmp.eq.s32.totalorder %s16, 0
      %p106 = por %p104, %p105
      %p107 = scmp.ne.s32.totalorder %s96, %s99
      %p108 = scmp.eq.s32.totalorder %s21, 1
      %p109 = por %p107, %p108
      %p110 = scmp.ne.s32.totalorder %s99, %s100
      %p111 = scmp.eq.s32.totalorder %s21, 0
      %p112 = por %p110, %p111
      %p113 = scmp.ne.s32.totalorder %s99, %s100
      %p114 = scmp.eq.s32.totalorder %s22, 1
      %p115 = por %p113, %p114
      %p117 = scmp.ne.s32.totalorder %s100, %s116
      %p118 = scmp.eq.s32.totalorder %s22, 0
      %p119 = por %p117, %p118
      %s120 = ssub.s32 %s23, %s35
      %s121 = ssub.s32 %s24, %s31
      %s122 = sor.u32 %s120, %s121
      %p123 = scmp.eq.s32.totalorder %s122, 0
      %s125 = sadd.s32 %s124, 1
      %s126 = scalar_select %p123, %s124, %s125
      %p129 = pneg %p123
      %p130 = scmp.eq.s32.totalorder %s16, 1
      %p131 = por %p129, %p130
      %p132 = scmp.ne.s32.totalorder %s124, %s127
      %p133 = scmp.eq.s32.totalorder %s16, 0
      %p134 = por %p132, %p133
      %p135 = scmp.ne.s32.totalorder %s124, %s127
      %p136 = scmp.eq.s32.totalorder %s21, 1
      %p137 = por %p135, %p136
      %p138 = scmp.ne.s32.totalorder %s127, %s128
      %p139 = scmp.eq.s32.totalorder %s21, 0
      %p140 = por %p138, %p139
      %p141 = scmp.ne.s32.totalorder %s127, %s128
      %p142 = scmp.eq.s32.totalorder %s22, 1
      %p143 = por %p141, %p142
      %p145 = scmp.ne.s32.totalorder %s128, %s144
      %p146 = scmp.eq.s32.totalorder %s22, 0
      %p147 = por %p145, %p146
      %p148 = scmp.le.s32.totalorder 1, %s16
      %p149 = scmp.lt.s32.totalorder %s16, 3
      %p150 = pnand %p148, %p149
      %p151 = pneg %p150
      // Predicated region
      $region9: #{tpu_custom_call.1} parent=5 // pred_check
        _
      $region10: #{tpu_custom_call.1} parent=5 // pred_check_branch
        %153 = sbr.rel (%p150) target = $region12
      $region11: #{tpu_custom_call.1} parent=5 // pred_region
        %s154 = ssub.s32 %s16, 1
      $region12: #{tpu_custom_call.1} parent=5 // pred_fallthru
        _
      %p155 = scmp.lt.s32.totalorder %s16, 2
      // Predicated region
      $region13: #{tpu_custom_call.1} parent=5 // pred_check
        %p156 = pneg %p155
      $region14: #{tpu_custom_call.1} parent=5 // pred_check_branch
        %158 = sbr.rel (%p156) target = $region16
      $region15: #{tpu_custom_call.1} parent=5 // pred_region
        // Predicated region
        $region17: #{tpu_custom_call.1} parent=15 // pred_check
          %p159 = pneg %p50
        $region18: #{tpu_custom_call.1} parent=15 // pred_check_branch
          %161 = sbr.rel (%p159) target = $region20
        $region19: #{tpu_custom_call.1} parent=15 // pred_region
          %s162 = sand.u32 %s40, 1
          %s163 = scalar_lea.sflag [#allocation3], %s162
          %s164 = sand.u32 %s40, 1
          %s165 = smul.addr %s164, 8
          %s166 = scalar_lea.vmem [#allocation2], %s165
          %s167 = smul.u32 2, %s24
          %169 = vsyncadd %s163, 0
          %s170 = smul.addr %s23, 2
          %s171 = sadd.s32 %s167, %s170
          %s172 = smul.addr %s171, 4
          %s173 = scalar_lea.hbm %s0, %s172
          %s175 = sshll.u32 %s173, 4
          %s176 = int_to_ptr.hbm [resolvable:$true] %s175
          %s177 = sshll.u32 %s166, 4
          %s178 = int_to_ptr.vmem [resolvable:$true] %s177
          %180 = dma.hbm_to_vmem [thread:$0]  %s176, 128, %s178, %s163
        $region20: #{tpu_custom_call.1} parent=15 // pred_fallthru
          _
        // Predicated region
        $region21: #{tpu_custom_call.1} parent=15 // pred_check
          %p181 = pneg %p78
        $region22: #{tpu_custom_call.1} parent=15 // pred_check_branch
          %183 = sbr.rel (%p181) target = $region24
        $region23: #{tpu_custom_call.1} parent=15 // pred_region
          %s184 = sand.u32 %s68, 1
          %s185 = scalar_lea.sflag [#allocation5], %s184
          %s186 = sand.u32 %s68, 1
          %s187 = smul.addr %s186, 2
          %s188 = scalar_lea.vmem [#allocation4], %s187
          %s189 = smul.u32 2, %s24
          %191 = vsyncadd %s185, 0
          %s192 = smul.addr %s23, 2
          %s193 = sadd.s32 %s189, %s192
          %s194 = scalar_lea.hbm %s1, %s193
          %s196 = sshll.u32 %s194, 4
          %s197 = int_to_ptr.hbm [resolvable:$true] %s196
          %s198 = sshll.u32 %s188, 4
          %s199 = int_to_ptr.vmem [resolvable:$true] %s198
          %201 = dma.hbm_to_vmem [thread:$0]  %s197, 32, %s199, %s185
        $region24: #{tpu_custom_call.1} parent=15 // pred_fallthru
          _
      $region16: #{tpu_custom_call.1} parent=5 // pred_fallthru
        _
      %p202 = scmp.le.s32.totalorder 1, %s16
      %p203 = scmp.lt.s32.totalorder %s16, 3
      %p204 = pnand %p202, %p203
      %p205 = pneg %p204
      // Predicated region
      $region25: #{tpu_custom_call.1} parent=5 // pred_check
        _
      $region26: #{tpu_custom_call.1} parent=5 // pred_check_branch
        %207 = sbr.rel (%p204) target = $region28
      $region27: #{tpu_custom_call.1} parent=5 // pred_region
        %s208 = ssub.s32 %s16, 1
        %s209 = sand.u32 %s43, 1
        %s210 = scalar_lea.sflag [#allocation3], %s209
        %s211 = sand.u32 %s43, 1
        %s212 = smul.addr %s211, 8
        %s213 = scalar_lea.vmem [#allocation2], %s212
        // Predicated region
        $region29: #{tpu_custom_call.1} parent=27 // pred_check
          %p214 = pneg %p56
        $region30: #{tpu_custom_call.1} parent=27 // pred_check_branch
          %216 = sbr.rel (%p214) target = $region32
        $region31: #{tpu_custom_call.1} parent=27 // pred_region
          %218 = dma.done %s210, 128
        $region32: #{tpu_custom_call.1} parent=27 // pred_fallthru
          _
        %s219 = sand.u32 %s71, 1
        %s220 = scalar_lea.sflag [#allocation5], %s219
        %s221 = sand.u32 %s71, 1
        %s222 = smul.addr %s221, 2
        %s223 = scalar_lea.vmem [#allocation4], %s222
        // Predicated region
        $region33: #{tpu_custom_call.1} parent=27 // pred_check
          %p224 = pneg %p84
        $region34: #{tpu_custom_call.1} parent=27 // pred_check_branch
          %226 = sbr.rel (%p224) target = $region36
        $region35: #{tpu_custom_call.1} parent=27 // pred_region
          %228 = dma.done %s220, 32
        $region36: #{tpu_custom_call.1} parent=27 // pred_fallthru
          _
        %s229 = sand.u32 %s43, 1
        %s230 = scalar_lea.sflag [#allocation3], %s229
        %s231 = sand.u32 %s43, 1
        %s232 = smul.addr %s231, 8
        %s233 = scalar_lea.vmem [#allocation2], %s232
        %p234 = pneg %p56
        %p235 = pneg %p53
        %s236 = sand.u32 %s71, 1
        %s237 = scalar_lea.sflag [#allocation5], %s236
        %s238 = sand.u32 %s71, 1
        %s239 = smul.addr %s238, 2
        %s240 = scalar_lea.vmem [#allocation4], %s239
        %p241 = pneg %p84
        %p242 = pneg %p81
        %p243 = pneg %p112
        %p244 = pneg %p109
        %p245 = scmp.lt.s32.totalorder %s25, 1
        %s246 = scalar_select %p245, %s25, 1
        %p247 = scmp.lt.s32.totalorder %s26, 0
        %s248 = scalar_select %p247, %s26, 0
        %s249 = sadd.s32 %s248, %s246
        %s250 = scalar_lea.vmem %s2, %s249
        %p251 = pneg %p140
        %p252 = pneg %p137
        %p253 = scmp.lt.s32.totalorder %s25, 1
        %s254 = scalar_select %p253, %s25, 1
        %p255 = scmp.lt.s32.totalorder %s26, 0
        %s256 = scalar_select %p255, %s26, 0
        %s257 = sadd.s32 %s256, %s254
        %s258 = scalar_lea.vmem %s3, %s257
        %s259 = smul.u32 2, %s26
        %s260 = smul.u32 2, %s26
        %p261 = scmp.lt.s32.totalorder %s25, 1
        %s262 = scalar_select %p261, %s25, 1
        %p263 = scmp.lt.s32.totalorder %s26, 0
        %s264 = scalar_select %p263, %s26, 0
        %s265 = sadd.s32 %s264, %s262
        %s266 = scalar_lea.vmem %s2, %s265
        %p267 = scmp.lt.s32.totalorder %s25, 1
        %s268 = scalar_select %p267, %s25, 1
        %p269 = scmp.lt.s32.totalorder %s26, 0
        %s270 = scalar_select %p269, %s26, 0
        %s271 = sadd.s32 %s270, %s268
        %s272 = scalar_lea.vmem %s3, %s271
        %v273 = vld [vmem:[%s213] sm:$0xff]
        %v274 = vld [vmem:[%s223] sm:$0x3]
        %276 = vst [vmem:[#allocation1] ss:$2 sm:$0xff] %v273
        %v277 = vld.sshfl [vmem:[#allocation1] sm:$0xff pattern:$0x75316420]
        %v278 = vld.sshfl [vmem:[#allocation1 + $0x8] sm:$0xff pattern:$0x75316420]
        %vm281 = vcmask 1043456
        %v282 = vsel %vm281, %v277, -inf
        %v283 = vrot.slane %v282, 4
        %v284 = vmax.f32 %v282, %v283
        %v285 = vrot.slane %v284, 2
        %v286 = vmax.f32 %v284, %v285
        %v287 = vrot.slane %v286, 1
        %v288 = vmax.f32 %v286, %v287
        %v289 = vsel %vm281, %v278, -inf
        %v290 = vrot.slane %v289, 4
        %v291 = vmax.f32 %v289, %v290
        %v292 = vrot.slane %v291, 2
        %v293 = vmax.f32 %v291, %v292
        %v294 = vrot.slane %v293, 1
        %v295 = vmax.f32 %v293, %v294
        %v298 = vrot.slane %v295, 4
        %v299 = vsel %vm281, %v288, %v298
        %v301 = vsub.f32 %v273, %v299
        %v302 = vmul.f32 %v301, 1.442695
        %v303 = vpow.pop %v302
        %305 = vst [vmem:[#allocation1] ss:$2 sm:$0xff] %v303
        %v306 = vld.sshfl [vmem:[#allocation1] sm:$0xff pattern:$0x75316420]
        %v307 = vld.sshfl [vmem:[#allocation1 + $0x8] sm:$0xff pattern:$0x75316420]
        %v310 = vsel %vm281, %v306, 0.0
        %v311 = vrot.slane %v310, 4
        %v312 = vadd.f32 %v310, %v311
        %v313 = vrot.slane %v312, 2
        %v314 = vadd.f32 %v312, %v313
        %v315 = vrot.slane %v314, 1
        %v316 = vadd.f32 %v314, %v315
        %v317 = vsel %vm281, %v307, 0.0
        %v318 = vrot.slane %v317, 4
        %v319 = vadd.f32 %v317, %v318
        %v320 = vrot.slane %v319, 2
        %v321 = vadd.f32 %v319, %v320
        %v322 = vrot.slane %v321, 1
        %v323 = vadd.f32 %v321, %v322
        %v324 = vlog2.pop %v316
        %v325 = vmul.f32 %v324, 0.6931472
        %v326 = vlog2.pop %v323
        %v327 = vmul.f32 %v326, 0.6931472
        %v328 = vlaneseq
        %v329 = vshrl.u32 %v328, 7
        %v330 = vperm.slane %v274, 0
        %v331 = vperm.slane %v274, 1
        %vm332 = vcmp.eq.s32.totalorder %v329, %v330
        %vm333 = vcmp.eq.s32.totalorder %v329, %v331
        %335 = vst [vmem:[#allocation1] ss:$2 sm:$0xff] %v301
        %v336 = vld.sshfl [vmem:[#allocation1] sm:$0xff pattern:$0x75316420]
        %v337 = vld.sshfl [vmem:[#allocation1 + $0x8] sm:$0xff pattern:$0x75316420]
        %v340 = vsel %vm332, %v336, 0.0
        %v341 = vsel %vm333, %v337, 0.0
        %v342 = vsel %vm281, %v340, 0.0
        %v343 = vrot.slane %v342, 4
        %v344 = vadd.f32 %v342, %v343
        %v345 = vrot.slane %v344, 2
        %v346 = vadd.f32 %v344, %v345
        %v347 = vrot.slane %v346, 1
        %v348 = vadd.f32 %v346, %v347
        %v349 = vsel %vm281, %v341, 0.0
        %v350 = vrot.slane %v349, 4
        %v351 = vadd.f32 %v349, %v350
        %v352 = vrot.slane %v351, 2
        %v353 = vadd.f32 %v351, %v352
        %v354 = vrot.slane %v353, 1
        %v355 = vadd.f32 %v353, %v354
        %v356 = vsub.f32 %v325, %v348
        %v357 = vsub.f32 %v327, %v355
        %s358 = smul.u32 %s26, 256
        %v359 = vlaneseq
        %v360 = vand.u32 %v359, 127
        %v361 = vadd.s32 %v360, 128
        %v362 = vstv %s358
        %v363 = vadd.s32 %v362, %v360
        %v364 = vadd.s32 %v362, %v361
        %vm365 = vcmp.ne.s32.totalorder %v274, 255
        %vm366 = vcmp.lt.s32.totalorder %v363, 256
        %vm367 = vcmp.lt.s32.totalorder %v364, 256
        %v368 = vsel %vm366, 1, 0
        %v369 = vsel %vm367, 1, 0
        %v370 = vrot.slane %v369, 7
        %vm371 = vcmask 1040384
        %v372 = vsel %vm371, %v368, %v370
        %vm373 = vcmp.ne.s32.totalorder %v372, 0
        %vm374 = vmand %vm365, %vm373
        %v377 = vrot.slane %v357, 7
        %v378 = vsel %vm371, %v356, %v377
        %v380 = vsel %vm374, %v378, 0.0
        %v382 = vperm.slane %v380, 0
        %v383 = vperm.slane %v380, 1
        %v386 = vsel %vm371, %v382, 0.0
        %v387 = vsel %vm371, %v383, 0.0
        %v388 = vadd.f32 %v386, %v387
        %389 = vadd.xlane.f32.xlu0 %v388
        %v390 = vpop.xlane.xlu0 %389
        %v391 = vsel %vm374, 1.0, 0.0
        %v393 = vperm.slane %v391, 0
        %v394 = vperm.slane %v391, 1
        %v397 = vsel %vm371, %v393, 0.0
        %v398 = vsel %vm371, %v394, 0.0
        %v399 = vadd.f32 %v397, %v398
        %400 = vadd.xlane.f32.xlu0 %v399
        %v401 = vpop.xlane.xlu0 %400
        %vm402 = vcmask 0
        %403 = vst.msk [vmem:[%s266] sm:$0x1] %vm402, %v390
        %404 = vst.msk [vmem:[%s272] sm:$0x1] %vm402, %v401
        %p405 = scmp.lt.s32.totalorder %s25, 1
        %s406 = scalar_select %p405, %s25, 1
        %p407 = scmp.lt.s32.totalorder %s26, 0
        %s408 = scalar_select %p407, %s26, 0
        %s409 = sadd.s32 %s408, %s406
        %s410 = scalar_lea.vmem %s2, %s409
        %p411 = scmp.lt.s32.totalorder %s25, 1
        %s412 = scalar_select %p411, %s25, 1
        %p413 = scmp.lt.s32.totalorder %s26, 0
        %s414 = scalar_select %p413, %s26, 0
        %s415 = sadd.s32 %s414, %s412
        %s416 = scalar_lea.vmem %s3, %s415
        // Predicated region
        $region37: #{tpu_custom_call.1} parent=27 // pred_check
          %p417 = pneg %p109
        $region38: #{tpu_custom_call.1} parent=27 // pred_check_branch
          %419 = sbr.rel (%p417) target = $region40
        $region39: #{tpu_custom_call.1} parent=27 // pred_region
          _
        $region40: #{tpu_custom_call.1} parent=27 // pred_fallthru
          _
        // Predicated region
        $region41: #{tpu_custom_call.1} parent=27 // pred_check
          %p420 = pneg %p137
        $region42: #{tpu_custom_call.1} parent=27 // pred_check_branch
          %422 = sbr.rel (%p420) target = $region44
        $region43: #{tpu_custom_call.1} parent=27 // pred_region
          _
        $region44: #{tpu_custom_call.1} parent=27 // pred_fallthru
          _
      $region28: #{tpu_custom_call.1} parent=5 // pred_fallthru
        _
      %p423 = scmp.le.s32.totalorder 2, %s16
      // Predicated region
      $region45: #{tpu_custom_call.1} parent=5 // pred_check
        %p424 = pneg %p423
      $region46: #{tpu_custom_call.1} parent=5 // pred_check_branch
        %426 = sbr.rel (%p424) target = $region48
      $region47: #{tpu_custom_call.1} parent=5 // pred_region
        %s427 = ssub.s32 %s16, 2
        // Predicated region
        $region49: #{tpu_custom_call.1} parent=47 // pred_check
          %p428 = pneg %p115
        $region50: #{tpu_custom_call.1} parent=47 // pred_check_branch
          %430 = sbr.rel (%p428) target = $region52
        $region51: #{tpu_custom_call.1} parent=47 // pred_region
          %p431 = scmp.lt.s32.totalorder %s27, 1
          %s432 = scalar_select %p431, %s27, 1
          %p433 = scmp.lt.s32.totalorder %s28, 0
          %s434 = scalar_select %p433, %s28, 0
          %s435 = sadd.s32 %s434, %s432
          %s436 = scalar_lea.vmem %s2, %s435
        $region52: #{tpu_custom_call.1} parent=47 // pred_fallthru
          _
        // Predicated region
        $region53: #{tpu_custom_call.1} parent=47 // pred_check
          %p437 = pneg %p143
        $region54: #{tpu_custom_call.1} parent=47 // pred_check_branch
          %439 = sbr.rel (%p437) target = $region56
        $region55: #{tpu_custom_call.1} parent=47 // pred_region
          %p440 = scmp.lt.s32.totalorder %s27, 1
          %s441 = scalar_select %p440, %s27, 1
          %p442 = scmp.lt.s32.totalorder %s28, 0
          %s443 = scalar_select %p442, %s28, 0
          %s444 = sadd.s32 %s443, %s441
          %s445 = scalar_lea.vmem %s3, %s444
        $region56: #{tpu_custom_call.1} parent=47 // pred_fallthru
          _
      $region48: #{tpu_custom_call.1} parent=5 // pred_fallthru
        _
    $region6: #{tpu_custom_call.1} parent=1 // loop_footer
      %s20 = sadd.s32 1, %s16
    $region7: #{tpu_custom_call.1} parent=1 // loop_footer_branch
      %15 = sbr.rel target = $region3
    $region8: #{tpu_custom_call.1} parent=1 // loop_exit
      _
    %446 = vsyncpa [#allocation3], 1
    %s447 = scalar_lea.sflag [#allocation3], 1
    %448 = vsyncpa %s447, 1
    %449 = vsyncpa [#allocation5], 1
    %s450 = scalar_lea.sflag [#allocation5], 1
    %451 = vsyncpa %s450, 1

</llo_original>
